<compile_context>
chip_gen: v5e
topology: v5e:2x2
jax: 0.10.0
libtpu: 0.0.40
codegen_flags: <defaults>
</compile_context>

<pallas_src>
import jax
import jax.numpy as jnp
from jax.experimental import pallas as pl
from jax.experimental.pallas import tpu as pltpu


def _cpd_kernel(sig_ref, feat_ref, w_ref, out_ref, rk_ref):
    """One batch tile: build rk' = [feat | rowkron(sig, feat)] then one matmul."""
    s_dim = sig_ref.shape[1]
    in_dim = feat_ref.shape[1]

    sig = sig_ref[...]                      # (bt, s_dim)  f32
    feat = feat_ref[...]                    # (bt, in_dim) f32

    # rk'[:, 0:in_dim]                 = feat           (pairs with M_1 rows of W)
    # rk'[:, (s+1)*in_dim:(s+2)*in_dim] = sig[:,s]*feat  (pairs with T1r rows of W)
    # Static strided stores into VMEM scratch ride the vst slot (no XLU concat).
    rk_ref[:, :in_dim] = feat.astype(rk_ref.dtype)
    for s in range(s_dim):
        rk_ref[:, (s + 1) * in_dim:(s + 2) * in_dim] = (
            sig[:, s:s + 1] * feat).astype(rk_ref.dtype)

    # Single MXU matmul, f32 accumulation.
    out_ref[...] = jnp.dot(rk_ref[...], w_ref[...],
                           preferred_element_type=jnp.float32
                           ).astype(out_ref.dtype)


def _choose_batch_tile(n, cap=4096):
    # Big tiles amortize the ~0.35us/grid-step overhead; per-tile VMEM at
    # bt=4096 is < 4 MB, comfortably inside every generation's scoped default
    # (including v7x's smaller 64 MiB VMEM).
    bt = min(cap, max(n, 8))
    if bt == n and n >= 2048:
        # Keep >=2 grid steps so both v7x TensorCores get work on the
        # "parallel" batch axis; the extra step is noise on v5e/v6e.
        bt = (n + 1) // 2
    return max(8, ((bt + 7) // 8) * 8)


def cpd_forward(signal, feature, A, B, C, M_1, *, R, s_dim, in_dim, out_dim,
                batch_tile=None, mxu_dtype=jnp.float32, out_dtype=jnp.float32):
    # --- parameter-only glue (mirrors the PyTorch module, plain JAX, tiny) ---
    AB = jnp.matmul(A, B).reshape(1, -1)                 # (1, in*out)
    ABC = jnp.matmul(C, AB).reshape(R, s_dim, -1)        # (R, s_dim, in*out)
    T_1 = jnp.sum(ABC, axis=0)                           # (s_dim, in*out)
    # Khatri-Rao reordering: T1r[s*in_dim + i, o] = T_1[s, i*out_dim + o].
    T1r = T_1.reshape(s_dim, in_dim, out_dim).reshape(s_dim * in_dim, out_dim)
    # Fused weight: out = [feat | rowkron] @ [M_1 ; T1r].
    W = jnp.concatenate([M_1, T1r], axis=0).astype(mxu_dtype)   # ((s+1)*in, out)

    signal = signal.reshape(-1, s_dim).astype(jnp.float32)
    feature = feature.reshape(-1, in_dim).astype(jnp.float32)
    N = signal.shape[0]

    bt = batch_tile if batch_tile is not None else _choose_batch_tile(N)
    grid = (pl.cdiv(N, bt),)
    # NOTE: the tail block may compute on out-of-bounds (garbage) rows; this is
    # safe because there is no cross-row reduction and Pallas masks the
    # out-of-bounds portion of the output writeback.

    return pl.pallas_call(
        _cpd_kernel,
        out_shape=jax.ShapeDtypeStruct((N, out_dim), out_dtype),
        grid_spec=pltpu.PrefetchScalarGridSpec(
            num_scalar_prefetch=0,
            grid=grid,
            in_specs=[
                pl.BlockSpec((bt, s_dim), lambda i: (i, 0)),          # signal tile
                pl.BlockSpec((bt, in_dim), lambda i: (i, 0)),         # feature tile
                pl.BlockSpec(((s_dim + 1) * in_dim, out_dim),
                             lambda i: (0, 0)),                       # resident W
            ],
            out_specs=pl.BlockSpec((bt, out_dim), lambda i: (i, 0)),
            scratch_shapes=[
                pltpu.VMEM((bt, (s_dim + 1) * in_dim), mxu_dtype),    # rk' scratch
            ],
        ),
        compiler_params=pltpu.CompilerParams(
            dimension_semantics=("parallel",)),
    )(signal, feature, W)


def cpd_reference(signal, feature, A, B, C, M_1, *, R, s_dim, in_dim, out_dim):
    AB = jnp.matmul(A, B).reshape(1, -1)
    ABC = jnp.matmul(C, AB).reshape(R, s_dim, -1)
    T_1 = jnp.sum(ABC, axis=0)
    w_1 = jnp.matmul(signal, T_1).reshape(-1, in_dim, out_dim)
    feat = feature.reshape(-1, 1, in_dim)
    x = jnp.matmul(feat, w_1 + M_1)
    return x.reshape(-1, out_dim)


def xavier_uniform(key, shape):
    fan_in, fan_out = shape
    bound = (6.0 / (fan_in + fan_out)) ** 0.5
    return jax.random.uniform(key, shape, jnp.float32, -bound, bound)


if __name__ == "__main__":
    R, s_dim, in_dim, out_dim = 4, 8, 8, 32

    key = jax.random.PRNGKey(0)
    kA, kB, kC, kM, ksig, kfeat = jax.random.split(key, 6)

    # deterministic xavier-uniform parameter init (same shapes as the module)
    A = xavier_uniform(kA, (in_dim, R))
    B = xavier_uniform(kB, (R, out_dim))
    C = xavier_uniform(kC, (R * s_dim, 1))
    M_1 = xavier_uniform(kM, (in_dim, out_dim))

    dims = dict(R=R, s_dim=s_dim, in_dim=in_dim, out_dim=out_dim)

    # --- small primary case (single grid step) ---
    N = 16
    signal = jax.random.normal(ksig, (N, s_dim), jnp.float32)
    feature = jax.random.normal(kfeat, (N, in_dim), jnp.float32)

    ref = cpd_reference(signal, feature, A, B, C, M_1, **dims)
    out = cpd_forward(signal, feature, A, B, C, M_1, **dims)   # f32 default feed
    out = jax.block_until_ready(out)
    assert out.shape == (N, out_dim)
    assert jnp.allclose(out, ref, atol=1e-4, rtol=1e-4), "f32 mismatch (N=16)"

    # --- multi-step grid with a masked partial tail block (N % bt != 0) ---
    N2 = 1000
    sig2 = jax.random.normal(jax.random.PRNGKey(1), (N2, s_dim), jnp.float32)
    feat2 = jax.random.normal(jax.random.PRNGKey(2), (N2, in_dim), jnp.float32)
    ref2 = cpd_reference(sig2, feat2, A, B, C, M_1, **dims)
    out2 = cpd_forward(sig2, feat2, A, B, C, M_1, **dims, batch_tile=128)
    out2 = jax.block_until_ready(out2)
    assert out2.shape == (N2, out_dim)
    assert jnp.allclose(out2, ref2, atol=1e-4, rtol=1e-4), "f32 mismatch (N=1000)"

    print("KERNEL_OK")
</pallas_src>

<mosaic_0001>
module attributes {stable_mosaic.version = 11 : i64} {
  func.func @_cpd_kernel(%arg0: i32, %arg1: memref<16x8xf32, #tpu.memory_space<vmem>>, %arg2: memref<16x8xf32, #tpu.memory_space<vmem>>, %arg3: memref<72x32xf32, #tpu.memory_space<vmem>>, %arg4: memref<16x32xf32, #tpu.memory_space<vmem>>, %arg5: memref<16x72xf32, #tpu.memory_space<vmem>>) attributes {dimension_semantics = [#tpu.dimension_semantics<parallel>], iteration_bounds = array<i64: 1>, scalar_prefetch = 0 : i64, scratch_operands = 1 : i64, tpu.core_type = #tpu.core_type<tc>, window_params = [{transform_indices = @transform_0, window_bounds = array<i64: 16, 8>}, {transform_indices = @transform_1, window_bounds = array<i64: 16, 8>}, {pipeline_mode = #tpu.pipeline_mode<synchronous>, transform_indices = @transform_2, window_bounds = array<i64: 72, 32>}, {transform_indices = @transform_3, window_bounds = array<i64: 16, 32>}]} {
    %c0 = arith.constant 0 : index
    %c0_0 = arith.constant 0 : index
    %0 = vector.load %arg1[%c0, %c0_0] : memref<16x8xf32, #tpu.memory_space<vmem>>, vector<16x8xf32>
    %c0_1 = arith.constant 0 : index
    %c0_2 = arith.constant 0 : index
    %1 = vector.load %arg2[%c0_1, %c0_2] : memref<16x8xf32, #tpu.memory_space<vmem>>, vector<16x8xf32>
    %c0_3 = arith.constant 0 : index
    %c0_4 = arith.constant 0 : index
    %2 = vector.load %arg5[%c0_3, %c0_4] : memref<16x72xf32, #tpu.memory_space<vmem>>, vector<16x8xf32>
    tpu.vector_store %arg5[%c0_3, %c0_4], %1 {strides = array<i32>} : memref<16x72xf32, #tpu.memory_space<vmem>>, vector<16x8xf32>,
    %3 = vector.extract_strided_slice %0 {offsets = [0, 0], sizes = [16, 1], strides = [1, 1]} : vector<16x8xf32> to vector<16x1xf32>
    %4 = vector.broadcast %3 : vector<16x1xf32> to vector<16x8xf32>
    %5 = arith.mulf %4, %1 : vector<16x8xf32>
    %c0_5 = arith.constant 0 : index
    %c8 = arith.constant 8 : index
    %6 = vector.load %arg5[%c0_5, %c8] : memref<16x72xf32, #tpu.memory_space<vmem>>, vector<16x8xf32>
    tpu.vector_store %arg5[%c0_5, %c8], %5 {strides = array<i32>} : memref<16x72xf32, #tpu.memory_space<vmem>>, vector<16x8xf32>,
    %7 = vector.extract_strided_slice %0 {offsets = [0, 1], sizes = [16, 1], strides = [1, 1]} : vector<16x8xf32> to vector<16x1xf32>
    %8 = vector.broadcast %7 : vector<16x1xf32> to vector<16x8xf32>
    %9 = arith.mulf %8, %1 : vector<16x8xf32>
    %c0_6 = arith.constant 0 : index
    %c16 = arith.constant 16 : index
    %10 = vector.load %arg5[%c0_6, %c16] : memref<16x72xf32, #tpu.memory_space<vmem>>, vector<16x8xf32>
    tpu.vector_store %arg5[%c0_6, %c16], %9 {strides = array<i32>} : memref<16x72xf32, #tpu.memory_space<vmem>>, vector<16x8xf32>,
    %11 = vector.extract_strided_slice %0 {offsets = [0, 2], sizes = [16, 1], strides = [1, 1]} : vector<16x8xf32> to vector<16x1xf32>
    %12 = vector.broadcast %11 : vector<16x1xf32> to vector<16x8xf32>
    %13 = arith.mulf %12, %1 : vector<16x8xf32>
    %c0_7 = arith.constant 0 : index
    %c24 = arith.constant 24 : index
    %14 = vector.load %arg5[%c0_7, %c24] : memref<16x72xf32, #tpu.memory_space<vmem>>, vector<16x8xf32>
    tpu.vector_store %arg5[%c0_7, %c24], %13 {strides = array<i32>} : memref<16x72xf32, #tpu.memory_space<vmem>>, vector<16x8xf32>,
    %15 = vector.extract_strided_slice %0 {offsets = [0, 3], sizes = [16, 1], strides = [1, 1]} : vector<16x8xf32> to vector<16x1xf32>
    %16 = vector.broadcast %15 : vector<16x1xf32> to vector<16x8xf32>
    %17 = arith.mulf %16, %1 : vector<16x8xf32>
    %c0_8 = arith.constant 0 : index
    %c32 = arith.constant 32 : index
    %18 = vector.load %arg5[%c0_8, %c32] : memref<16x72xf32, #tpu.memory_space<vmem>>, vector<16x8xf32>
    tpu.vector_store %arg5[%c0_8, %c32], %17 {strides = array<i32>} : memref<16x72xf32, #tpu.memory_space<vmem>>, vector<16x8xf32>,
    %19 = vector.extract_strided_slice %0 {offsets = [0, 4], sizes = [16, 1], strides = [1, 1]} : vector<16x8xf32> to vector<16x1xf32>
    %20 = vector.broadcast %19 : vector<16x1xf32> to vector<16x8xf32>
    %21 = arith.mulf %20, %1 : vector<16x8xf32>
    %c0_9 = arith.constant 0 : index
    %c40 = arith.constant 40 : index
    %22 = vector.load %arg5[%c0_9, %c40] : memref<16x72xf32, #tpu.memory_space<vmem>>, vector<16x8xf32>
    tpu.vector_store %arg5[%c0_9, %c40], %21 {strides = array<i32>} : memref<16x72xf32, #tpu.memory_space<vmem>>, vector<16x8xf32>,
    %23 = vector.extract_strided_slice %0 {offsets = [0, 5], sizes = [16, 1], strides = [1, 1]} : vector<16x8xf32> to vector<16x1xf32>
    %24 = vector.broadcast %23 : vector<16x1xf32> to vector<16x8xf32>
    %25 = arith.mulf %24, %1 : vector<16x8xf32>
    %c0_10 = arith.constant 0 : index
    %c48 = arith.constant 48 : index
    %26 = vector.load %arg5[%c0_10, %c48] : memref<16x72xf32, #tpu.memory_space<vmem>>, vector<16x8xf32>
    tpu.vector_store %arg5[%c0_10, %c48], %25 {strides = array<i32>} : memref<16x72xf32, #tpu.memory_space<vmem>>, vector<16x8xf32>,
    %27 = vector.extract_strided_slice %0 {offsets = [0, 6], sizes = [16, 1], strides = [1, 1]} : vector<16x8xf32> to vector<16x1xf32>
    %28 = vector.broadcast %27 : vector<16x1xf32> to vector<16x8xf32>
    %29 = arith.mulf %28, %1 : vector<16x8xf32>
    %c0_11 = arith.constant 0 : index
    %c56 = arith.constant 56 : index
    %30 = vector.load %arg5[%c0_11, %c56] : memref<16x72xf32, #tpu.memory_space<vmem>>, vector<16x8xf32>
    tpu.vector_store %arg5[%c0_11, %c56], %29 {strides = array<i32>} : memref<16x72xf32, #tpu.memory_space<vmem>>, vector<16x8xf32>,
    %31 = vector.extract_strided_slice %0 {offsets = [0, 7], sizes = [16, 1], strides = [1, 1]} : vector<16x8xf32> to vector<16x1xf32>
    %32 = vector.broadcast %31 : vector<16x1xf32> to vector<16x8xf32>
    %33 = arith.mulf %32, %1 : vector<16x8xf32>
    %c0_12 = arith.constant 0 : index
    %c64 = arith.constant 64 : index
    %34 = vector.load %arg5[%c0_12, %c64] : memref<16x72xf32, #tpu.memory_space<vmem>>, vector<16x8xf32>
    tpu.vector_store %arg5[%c0_12, %c64], %33 {strides = array<i32>} : memref<16x72xf32, #tpu.memory_space<vmem>>, vector<16x8xf32>,
    %c0_13 = arith.constant 0 : index
    %c0_14 = arith.constant 0 : index
    %35 = vector.load %arg5[%c0_13, %c0_14] : memref<16x72xf32, #tpu.memory_space<vmem>>, vector<16x72xf32>
    %c0_15 = arith.constant 0 : index
    %c0_16 = arith.constant 0 : index
    %36 = vector.load %arg3[%c0_15, %c0_16] : memref<72x32xf32, #tpu.memory_space<vmem>>, vector<72x32xf32>
    %cst = arith.constant dense<0.000000e+00> : vector<16x32xf32>
    %37 = tpu.matmul %35, %36, %cst {dimension_numbers = #tpu.dot_dimension_numbers<[1], [0], [0], [1], [0, 0, 1, 1], [], []>} : vector<16x72xf32>, vector<72x32xf32>, vector<16x32xf32> -> vector<16x32xf32>
    %c0_17 = arith.constant 0 : index
    %c0_18 = arith.constant 0 : index
    %38 = vector.load %arg4[%c0_17, %c0_18] : memref<16x32xf32, #tpu.memory_space<vmem>>, vector<16x32xf32>
    tpu.vector_store %arg4[%c0_17, %c0_18], %37 {strides = array<i32>} : memref<16x32xf32, #tpu.memory_space<vmem>>, vector<16x32xf32>,
    return
  }
  func.func @transform_0(%arg0: i32) -> (i32, i32) {
    %c0_i32 = arith.constant 0 : i32
    %c0_i32_0 = arith.constant 0 : i32
    return %arg0, %c0_i32 : i32, i32
  }
  func.func @transform_1(%arg0: i32) -> (i32, i32) {
    %c0_i32 = arith.constant 0 : i32
    %c0_i32_0 = arith.constant 0 : i32
    return %arg0, %c0_i32 : i32, i32
  }
  func.func @transform_2(%arg0: i32) -> (i32, i32) {
    %c0_i32 = arith.constant 0 : i32
    %c0_i32_0 = arith.constant 0 : i32
    %c0_i32_1 = arith.constant 0 : i32
    return %c0_i32, %c0_i32_0 : i32, i32
  }
  func.func @transform_3(%arg0: i32) -> (i32, i32) {
    %c0_i32 = arith.constant 0 : i32
    %c0_i32_0 = arith.constant 0 : i32
    return %arg0, %c0_i32 : i32, i32
  }
}

</mosaic_0001>

<llo_original>
// kernel: tpu_custom_call.1
$region0: #{tpu_custom_call.1}
  #allocation0 [shape = 'u32[]', space=smem, size = 0x4, offset = 0x4, fixed_abs, tag = 'smem constant byte address 0x4 - core index']
  #allocation1 [shape = 'u32[72,128]{1,0:T(1,128)}', space=vmem, size = 0x9000, scoped, tag = 'internal scratch']
  #allocation2 [shape = 'f32[16,72]{1,0:T(8,128)}', space=vmem, size = 0x2000, scoped, tag = 'scratch operand']
  %s0 = inlined_call_operand.vmem [shape: f32[16,8], index: 0, kind: input, shape index: {}]
  %s1 = inlined_call_operand.vmem [shape: f32[16,8], index: 1, kind: input, shape index: {}]
  %s2 = inlined_call_operand.vmem [shape: f32[72,32], index: 2, kind: input, shape index: {}]
  %s3 = inlined_call_operand.hbm [shape: f32[16,32], index: 3, kind: output, shape index: {}]
  %s4 = sld [smem:[#allocation0]]
  $region22: #{tpu_custom_call.1} parent=0
    _
  %s6 = ssub.s32 1, %s4
  %s7 = scalar_select 0, %s6, %s4
  $region1: #{tpu_custom_call.1} parent=0
    #allocation3 [shape = 'u8[8192]{0}', space=vmem, size = 0x2000, scoped, tag = 'output window, operand 0, single buffered']
    #allocation4 [shape = 's32[1]{0}', space=sflag, size = 0x4, scoped, tag = 'scoped memory for tpu_custom_call.1']
    %8 = vsyncpa [#allocation4], 0
    // Predicated region
    $region2: #{tpu_custom_call.1} parent=1 // pred_check
      _
    $region3: #{tpu_custom_call.1} parent=1 // pred_check_branch
      %10 = sbr.rel (0) target = $region5
    $region4: #{tpu_custom_call.1} parent=1 // pred_region
      _
    $region5: #{tpu_custom_call.1} parent=1 // pred_fallthru
      _
    // Predicated region
    $region6: #{tpu_custom_call.1} parent=1 // pred_check
      _
    $region7: #{tpu_custom_call.1} parent=1 // pred_check_branch
      %12 = sbr.rel (0) target = $region9
    $region8: #{tpu_custom_call.1} parent=1 // pred_region
      _
    $region9: #{tpu_custom_call.1} parent=1 // pred_fallthru
      _
    // Predicated region
    $region10: #{tpu_custom_call.1} parent=1 // pred_check
      _
    $region11: #{tpu_custom_call.1} parent=1 // pred_check_branch
      %14 = sbr.rel (0) target = $region13
    $region12: #{tpu_custom_call.1} parent=1 // pred_region
      _
    $region13: #{tpu_custom_call.1} parent=1 // pred_fallthru
      _
    %v15 = vld [vmem:[%s0] sm:$0xff]
    %v16 = vld [vmem:[%s0 + $0x8] sm:$0xff]
    %v17 = vld [vmem:[%s1] sm:$0xff]
    %v18 = vld [vmem:[%s1 + $0x8] sm:$0xff]
    %vm19 = vcmask 64512
    %20 = vst.msk [vmem:[#allocation2] sm:$0xff] %vm19, %v17
    %21 = vst.msk [vmem:[#allocation2 + $0x8] sm:$0xff] %vm19, %v18
    %23 = vset.pattern.permute.xlu0 0
    %24 = vperm.xlu0 %23, %v15
    %v25 = vpop.permute.xlu0 %24
    %28 = vset.pattern.permute.xlu0 0
    %29 = vperm.xlu0 %28, %v16
    %v30 = vpop.permute.xlu0 %29
    %v32 = vmul.f32 %v25, %v17
    %v33 = vmul.f32 %v30, %v18
    %36 = vrot.lane.b32.xlu0 %v32, 8
    %v37 = vpop.permute.xlu0 %36
    %38 = vrot.lane.b32.xlu0 %v33, 8
    %v39 = vpop.permute.xlu0 %38
    %vm42 = vcmask 130112
    %43 = vst.msk [vmem:[#allocation2] sm:$0xff] %vm42, %v37
    %44 = vst.msk [vmem:[#allocation2 + $0x8] sm:$0xff] %vm42, %v39
    %45 = vset.pattern.permute.xlu0 1
    %46 = vperm.xlu0 %45, %v15
    %v47 = vpop.permute.xlu0 %46
    %49 = vset.pattern.permute.xlu0 1
    %50 = vperm.xlu0 %49, %v16
    %v51 = vpop.permute.xlu0 %50
    %v53 = vmul.f32 %v47, %v17
    %v54 = vmul.f32 %v51, %v18
    %57 = vrot.lane.b32.xlu0 %v53, 16
    %v58 = vpop.permute.xlu0 %57
    %59 = vrot.lane.b32.xlu0 %v54, 16
    %v60 = vpop.permute.xlu0 %59
    %vm63 = vcmask 195712
    %64 = vst.msk [vmem:[#allocation2] sm:$0xff] %vm63, %v58
    %65 = vst.msk [vmem:[#allocation2 + $0x8] sm:$0xff] %vm63, %v60
    %66 = vset.pattern.permute.xlu0 2
    %67 = vperm.xlu0 %66, %v15
    %v68 = vpop.permute.xlu0 %67
    %70 = vset.pattern.permute.xlu0 2
    %71 = vperm.xlu0 %70, %v16
    %v72 = vpop.permute.xlu0 %71
    %v74 = vmul.f32 %v68, %v17
    %v75 = vmul.f32 %v72, %v18
    %78 = vrot.lane.b32.xlu0 %v74, 24
    %v79 = vpop.permute.xlu0 %78
    %80 = vrot.lane.b32.xlu0 %v75, 24
    %v81 = vpop.permute.xlu0 %80
    %vm84 = vcmask 261312
    %85 = vst.msk [vmem:[#allocation2] sm:$0xff] %vm84, %v79
    %86 = vst.msk [vmem:[#allocation2 + $0x8] sm:$0xff] %vm84, %v81
    %87 = vset.pattern.permute.xlu0 3
    %88 = vperm.xlu0 %87, %v15
    %v89 = vpop.permute.xlu0 %88
    %91 = vset.pattern.permute.xlu0 3
    %92 = vperm.xlu0 %91, %v16
    %v93 = vpop.permute.xlu0 %92
    %v95 = vmul.f32 %v89, %v17
    %v96 = vmul.f32 %v93, %v18
    %99 = vrot.lane.b32.xlu0 %v95, 32
    %v100 = vpop.permute.xlu0 %99
    %101 = vrot.lane.b32.xlu0 %v96, 32
    %v102 = vpop.permute.xlu0 %101
    %vm105 = vcmask 326912
    %106 = vst.msk [vmem:[#allocation2] sm:$0xff] %vm105, %v100
    %107 = vst.msk [vmem:[#allocation2 + $0x8] sm:$0xff] %vm105, %v102
    %108 = vset.pattern.permute.xlu0 4
    %109 = vperm.xlu0 %108, %v15
    %v110 = vpop.permute.xlu0 %109
    %112 = vset.pattern.permute.xlu0 4
    %113 = vperm.xlu0 %112, %v16
    %v114 = vpop.permute.xlu0 %113
    %v116 = vmul.f32 %v110, %v17
    %v117 = vmul.f32 %v114, %v18
    %120 = vrot.lane.b32.xlu0 %v116, 40
    %v121 = vpop.permute.xlu0 %120
    %122 = vrot.lane.b32.xlu0 %v117, 40
    %v123 = vpop.permute.xlu0 %122
    %vm126 = vcmask 392512
    %127 = vst.msk [vmem:[#allocation2] sm:$0xff] %vm126, %v121
    %128 = vst.msk [vmem:[#allocation2 + $0x8] sm:$0xff] %vm126, %v123
    %129 = vset.pattern.permute.xlu0 5
    %130 = vperm.xlu0 %129, %v15
    %v131 = vpop.permute.xlu0 %130
    %133 = vset.pattern.permute.xlu0 5
    %134 = vperm.xlu0 %133, %v16
    %v135 = vpop.permute.xlu0 %134
    %v137 = vmul.f32 %v131, %v17
    %v138 = vmul.f32 %v135, %v18
    %141 = vrot.lane.b32.xlu0 %v137, 48
    %v142 = vpop.permute.xlu0 %141
    %143 = vrot.lane.b32.xlu0 %v138, 48
    %v144 = vpop.permute.xlu0 %143
    %vm147 = vcmask 458112
    %148 = vst.msk [vmem:[#allocation2] sm:$0xff] %vm147, %v142
    %149 = vst.msk [vmem:[#allocation2 + $0x8] sm:$0xff] %vm147, %v144
    %150 = vset.pattern.permute.xlu0 6
    %151 = vperm.xlu0 %150, %v15
    %v152 = vpop.permute.xlu0 %151
    %154 = vset.pattern.permute.xlu0 6
    %155 = vperm.xlu0 %154, %v16
    %v156 = vpop.permute.xlu0 %155
    %v158 = vmul.f32 %v152, %v17
    %v159 = vmul.f32 %v156, %v18
    %162 = vrot.lane.b32.xlu0 %v158, 56
    %v163 = vpop.permute.xlu0 %162
    %164 = vrot.lane.b32.xlu0 %v159, 56
    %v165 = vpop.permute.xlu0 %164
    %vm168 = vcmask 523712
    %169 = vst.msk [vmem:[#allocation2] sm:$0xff] %vm168, %v163
    %170 = vst.msk [vmem:[#allocation2 + $0x8] sm:$0xff] %vm168, %v165
    %171 = vset.pattern.permute.xlu0 7
    %172 = vperm.xlu0 %171, %v15
    %v173 = vpop.permute.xlu0 %172
    %175 = vset.pattern.permute.xlu0 7
    %176 = vperm.xlu0 %175, %v16
    %v177 = vpop.permute.xlu0 %176
    %v179 = vmul.f32 %v173, %v17
    %v180 = vmul.f32 %v177, %v18
    %183 = vrot.lane.b32.xlu0 %v179, 64
    %v184 = vpop.permute.xlu0 %183
    %185 = vrot.lane.b32.xlu0 %v180, 64
    %v186 = vpop.permute.xlu0 %185
    %vm189 = vcmask 589312
    %190 = vst.msk [vmem:[#allocation2] sm:$0xff] %vm189, %v184
    %191 = vst.msk [vmem:[#allocation2 + $0x8] sm:$0xff] %vm189, %v186
    %v192 = vld [vmem:[#allocation2] sm:$0xff]
    %v193 = vld [vmem:[#allocation2 + $0x8] sm:$0xff]
    %v194 = vld [vmem:[%s2] sm:$0xff]
    %v195 = vld [vmem:[%s2 + $0x8] sm:$0xff]
    %v196 = vld [vmem:[%s2 + $0x10] sm:$0xff]
    %v197 = vld [vmem:[%s2 + $0x18] sm:$0xff]
    %v198 = vld [vmem:[%s2 + $0x20] sm:$0xff]
    %v199 = vld [vmem:[%s2 + $0x28] sm:$0xff]
    %v200 = vld [vmem:[%s2 + $0x30] sm:$0xff]
    %v201 = vld [vmem:[%s2 + $0x38] sm:$0xff]
    %v202 = vld [vmem:[%s2 + $0x40] sm:$0xff]
    %vm203 = vcmask 588800
    %v205 = vsel %vm203, %v192, 0
    %v208 = vsel %vm203, %v193, 0
    %210 = vmatpush.msra.mxu0 0.0
    %211 = vmatpush.msra.mxu0 0.0
    %212 = vmatpush.msra.mxu0 0.0
    %213 = vmatpush.msra.mxu0 0.0
    %214 = vmatpush.msra.mxu0 0.0
    %215 = vmatpush.msra.mxu0 0.0
    %216 = vmatpush.msra.mxu0 0.0
    %217 = vmatpush.msra.mxu0 %v202
    %218 = vmatpush.msra.mxu0 %v201
    %219 = vmatpush.msra.mxu0 %v200
    %220 = vmatpush.msra.mxu0 %v199
    %221 = vmatpush.msra.mxu0 %v198
    %222 = vmatpush.msra.mxu0 %v197
    %223 = vmatpush.msra.mxu0 %v196
    %224 = vmatpush.msra.mxu0 %v195
    %225 = vmatpush.msra.mxu0 %v194
    %226 = vmatmul.f32.gmra.mxu0 %v205
    %v227 = vpop.f32.mrf.mxu0
    %v228 = vadd.f32 0.0, %v227
    %229 = vmatmul.f32.gmra.mxu0 %v208
    %v230 = vpop.f32.mrf.mxu0
    %v231 = vadd.f32 0.0, %v230
    %232 = vdwg.mxu0
    %vm233 = vcmask 261120
    %234 = vst.msk [vmem:[#allocation3] sm:$0xff] %vm233, %v228
    %235 = vst.msk [vmem:[#allocation3 + $0x8] sm:$0xff] %vm233, %v231
    // Predicated region
    $region14: #{tpu_custom_call.1} parent=1 // pred_check
      _
    $region15: #{tpu_custom_call.1} parent=1 // pred_check_branch
      %237 = sbr.rel (0) target = $region17
    $region16: #{tpu_custom_call.1} parent=1 // pred_region
      %239 = vsyncadd [#allocation4], 0
      %s240 = sshll.u32 [#allocation3], 4
      %s241 = int_to_ptr.vmem [resolvable:$true] %s240
      %s242 = sshll.u32 %s3, 4
      %s243 = int_to_ptr.hbm [resolvable:$true] %s242
      %248 = dma.vmem_to_hbm [thread:$0]  %s241, 256, %s243, [#allocation4], 128, 128, 8
    $region17: #{tpu_custom_call.1} parent=1 // pred_fallthru
      _
    // Predicated region
    $region18: #{tpu_custom_call.1} parent=1 // pred_check
      _
    $region19: #{tpu_custom_call.1} parent=1 // pred_check_branch
      %250 = sbr.rel (0) target = $region21
    $region20: #{tpu_custom_call.1} parent=1 // pred_region
      %252 = dma.done [#allocation4], 256
    $region21: #{tpu_custom_call.1} parent=1 // pred_fallthru
      _
    %253 = vsyncpa [#allocation4], 1

</llo_original>
